<compile_context>
chip_gen: v7x
topology: tpu7x:2x2x1
jax: 0.10.0
libtpu: 0.0.40
codegen_flags: <defaults>
</compile_context>

<pallas_src>
import jax
import jax.numpy as jnp
from jax.experimental import pallas as pl
from jax.experimental.pallas import tpu as pltpu

# Lane-tile cap: big enough to amortize the ~0.35 us grid-step overhead,
# small enough (~5 MiB/step of VMEM) to fit every generation's default
# scoped-VMEM limit (16 MiB v5e, 32 MiB v6e/v7x, 64 MiB physical on v7x).
_TB_CAP = 8192


def _round_up(x, m):
    return ((x + m - 1) // m) * m


def _weight_training_kernel(xt_ref, w1_ref, b1_ref, w2_ref, b2_ref,
                            w3_ref, b3_ref, out_ref):
    # xt_ref: (D, TB) f32 slab, batch on the lane axis.
    xt = xt_ref[...]

    # Layer 1: Linear -> ReLU   (Dropout is identity at inference)
    h = jnp.dot(w1_ref[...], xt, preferred_element_type=jnp.float32)
    h = jnp.maximum(h + b1_ref[...], 0.0)                    # (H1, TB) f32

    # Layer 2: Linear -> ReLU   (Dropout is identity at inference)
    h = jnp.dot(w2_ref[...], h, preferred_element_type=jnp.float32)
    h = jnp.maximum(h + b2_ref[...], 0.0)                    # (H2, TB) f32

    # Final Linear -> Softmax over the feature (sublane) axis.
    logits = jnp.dot(w3_ref[...], h,
                     preferred_element_type=jnp.float32) + b3_ref[...]  # (Wd, TB)
    m = jnp.max(logits, axis=0, keepdims=True)                # (1, TB)
    e = jnp.exp(logits - m)                                   # (Wd, TB)
    denom = jnp.sum(e, axis=0, keepdims=True)                 # (1, TB)
    weights = e * pl.reciprocal(denom, approx=False)          # exact softmax

    # out = sum(weights * x, dim=-1)  -> lane-dense (1, TB) output row.
    out_ref[...] = jnp.sum(weights * xt, axis=0,
                           keepdims=True).astype(out_ref.dtype)


def weight_training_forward_xt(xt, params, *, batch_tile=None):
    """Fast path: xt is x already transposed, shape (input_dims, B), f32.

    Zero wrapper passes over x (beyond an optional pad of the batch axis to a
    128-lane multiple).  Returns out: (B,) f32."""
    w1, b1, w2, b2, w3, b3 = params          # w*: (out, in), b*: (out, 1)
    D, B = xt.shape
    H1 = w1.shape[0]
    H2 = w2.shape[0]
    Wd = w3.shape[0]
    assert Wd == D, "weight_dims must equal input_dims for weights*input"

    # Pad the batch (lane) axis only to a 128 multiple, and only when needed.
    B_pad = _round_up(B, 128)
    if B_pad != B:
        xt = jnp.pad(xt, ((0, 0), (0, B_pad - B)))

    # Tile choice: single grid step whenever the whole batch fits one tile
    # (best on single-TC v5e/v6e and for small batches on v7x); otherwise
    # 8192-lane steps so each step carries enough work to amortize the
    # per-step overhead and v7x can shard the 'parallel' axis across its two
    # TensorCores.  A ragged last block is handled by Pallas.
    if batch_tile is None:
        TB = min(B_pad, _TB_CAP)
    else:
        TB = min(B_pad, max(128, _round_up(batch_tile, 128)))
    n_steps = pl.cdiv(B_pad, TB)

    out = pl.pallas_call(
        _weight_training_kernel,
        out_shape=jax.ShapeDtypeStruct((1, B_pad), jnp.float32),
        grid_spec=pltpu.PrefetchScalarGridSpec(
            num_scalar_prefetch=0,
            grid=(n_steps,),
            in_specs=[
                # Streamed per step (lane-dense slab).
                pl.BlockSpec((D, TB), lambda i: (0, i)),      # x^T
                # Constant index maps -> VMEM-resident across all steps.
                pl.BlockSpec((H1, D), lambda i: (0, 0)),      # W1
                pl.BlockSpec((H1, 1), lambda i: (0, 0)),      # b1
                pl.BlockSpec((H2, H1), lambda i: (0, 0)),     # W2
                pl.BlockSpec((H2, 1), lambda i: (0, 0)),      # b2
                pl.BlockSpec((Wd, H2), lambda i: (0, 0)),     # W3
                pl.BlockSpec((Wd, 1), lambda i: (0, 0)),      # b3
            ],
            out_specs=pl.BlockSpec((1, TB), lambda i: (0, i)),
        ),
        compiler_params=pltpu.CompilerParams(
            dimension_semantics=("parallel",)),
    )(xt, w1, b1, w2, b2, w3, b3)
    return out[0, :B]


def weight_training_forward(x, params, *, batch_tile=None):
    """Module-native entry point: x is (B, input_dims) f32.

    Performs exactly one host-side layout pass (the transpose to (D, B));
    producers that can supply x^T directly should call
    weight_training_forward_xt to avoid it."""
    return weight_training_forward_xt(x.T, params, batch_tile=batch_tile)


def init_params(key, input_dims, weight_dims, neuron_nums):
    """PyTorch-style (uniform +/- 1/sqrt(fan_in)) init.
    Weights in PyTorch layout (out_features, in_features); biases (out, 1)."""
    dims = [input_dims] + list(neuron_nums) + [weight_dims]
    params = []
    for i in range(len(dims) - 1):
        fan_in, fan_out = dims[i], dims[i + 1]
        key, kw, kb = jax.random.split(key, 3)
        bound = 1.0 / (fan_in ** 0.5)
        w = jax.random.uniform(kw, (fan_out, fan_in), jnp.float32, -bound, bound)
        b = jax.random.uniform(kb, (fan_out, 1), jnp.float32, -bound, bound)
        params += [w, b]
    return tuple(params)


def _reference_forward(x, params):
    """Plain-JAX f32 reference (matches the PyTorch module's eval forward)."""
    w1, b1, w2, b2, w3, b3 = params
    h = jnp.maximum(x @ w1.T + b1[:, 0], 0.0)
    h = jnp.maximum(h @ w2.T + b2[:, 0], 0.0)
    logits = h @ w3.T + b3[:, 0]
    weights = jax.nn.softmax(logits, axis=-1)
    return jnp.sum(weights * x, axis=-1)


if __name__ == "__main__":
    # Shapes consistent with the module:
    #   input_dims = weight_dims = 16, neuron_nums = [32, 32]
    input_dims = 16
    weight_dims = 16
    neuron_nums = [32, 32]
    batch = 512

    key = jax.random.PRNGKey(0)
    key, kx = jax.random.split(key)
    x = jax.random.normal(kx, (batch, input_dims), dtype=jnp.float32)
    params = init_params(key, input_dims, weight_dims, neuron_nums)

    ref = _reference_forward(x, params)

    # Default path: f32 end-to-end, single grid step (TB = 512).
    out = jax.block_until_ready(weight_training_forward(x, params))
    assert out.shape == (batch,)
    assert jnp.allclose(out, ref, atol=1e-2, rtol=1e-2), (out, ref)

    # Zero-wrapper fast path (x already supplied as (D, B)).
    out_xt = jax.block_until_ready(weight_training_forward_xt(x.T, params))
    assert jnp.allclose(out_xt, ref, atol=1e-2, rtol=1e-2), (out_xt, ref)

    # Ragged batch: exercises the 128-lane pad path (B=200 -> B_pad=256,
    # single grid step).
    out_r = jax.block_until_ready(weight_training_forward(x[:200], params))
    assert out_r.shape == (200,)
    assert jnp.allclose(out_r, ref[:200], atol=1e-2, rtol=1e-2), (out_r, ref[:200])

    # Multi-step + ragged last block: B=300 -> B_pad=384 with batch_tile=256
    # gives 2 grid steps whose second block runs past the array; the
    # out-of-bounds lanes are discarded by Pallas on writeback.
    out_m = jax.block_until_ready(
        weight_training_forward(x[:300], params, batch_tile=256))
    assert out_m.shape == (300,)
    assert jnp.allclose(out_m, ref[:300], atol=1e-2, rtol=1e-2), (out_m, ref[:300])

    print("KERNEL_OK")
</pallas_src>

<mosaic_0001>
module attributes {stable_mosaic.version = 11 : i64} {
  func.func @_weight_training_kernel(%arg0: i32, %arg1: memref<16x512xf32, #tpu.memory_space<vmem>>, %arg2: memref<32x16xf32, #tpu.memory_space<vmem>>, %arg3: memref<32x1xf32, #tpu.memory_space<vmem>>, %arg4: memref<32x32xf32, #tpu.memory_space<vmem>>, %arg5: memref<32x1xf32, #tpu.memory_space<vmem>>, %arg6: memref<16x32xf32, #tpu.memory_space<vmem>>, %arg7: memref<16x1xf32, #tpu.memory_space<vmem>>, %arg8: memref<1x512xf32, #tpu.memory_space<vmem>>) attributes {dimension_semantics = [#tpu.dimension_semantics<parallel>], iteration_bounds = array<i64: 1>, scalar_prefetch = 0 : i64, scratch_operands = 0 : i64, tpu.core_type = #tpu.core_type<tc>, window_params = [{transform_indices = @transform_0, window_bounds = array<i64: 16, 512>}, {pipeline_mode = #tpu.pipeline_mode<synchronous>, transform_indices = @transform_1, window_bounds = array<i64: 32, 16>}, {pipeline_mode = #tpu.pipeline_mode<synchronous>, transform_indices = @transform_2, window_bounds = array<i64: 32, 1>}, {pipeline_mode = #tpu.pipeline_mode<synchronous>, transform_indices = @transform_3, window_bounds = array<i64: 32, 32>}, {pipeline_mode = #tpu.pipeline_mode<synchronous>, transform_indices = @transform_4, window_bounds = array<i64: 32, 1>}, {pipeline_mode = #tpu.pipeline_mode<synchronous>, transform_indices = @transform_5, window_bounds = array<i64: 16, 32>}, {pipeline_mode = #tpu.pipeline_mode<synchronous>, transform_indices = @transform_6, window_bounds = array<i64: 16, 1>}, {transform_indices = @transform_7, window_bounds = array<i64: 1, 512>}]} {
    %c0 = arith.constant 0 : index
    %c0_0 = arith.constant 0 : index
    %0 = vector.load %arg1[%c0, %c0_0] : memref<16x512xf32, #tpu.memory_space<vmem>>, vector<16x512xf32>
    %c0_1 = arith.constant 0 : index
    %c0_2 = arith.constant 0 : index
    %1 = vector.load %arg2[%c0_1, %c0_2] : memref<32x16xf32, #tpu.memory_space<vmem>>, vector<32x16xf32>
    %cst = arith.constant dense<0.000000e+00> : vector<32x512xf32>
    %2 = tpu.matmul %1, %0, %cst {dimension_numbers = #tpu.dot_dimension_numbers<[1], [0], [0], [1], [0, 0, 1, 1], [], []>} : vector<32x16xf32>, vector<16x512xf32>, vector<32x512xf32> -> vector<32x512xf32>
    %c0_3 = arith.constant 0 : index
    %c0_4 = arith.constant 0 : index
    %3 = vector.load %arg3[%c0_3, %c0_4] : memref<32x1xf32, #tpu.memory_space<vmem>>, vector<32x1xf32>
    %4 = vector.broadcast %3 : vector<32x1xf32> to vector<32x512xf32>
    %5 = arith.addf %2, %4 : vector<32x512xf32>
    %cst_5 = arith.constant 0.000000e+00 : f32
    %6 = vector.broadcast %cst_5 : f32 to vector<32x512xf32>
    %7 = arith.maximumf %5, %6 : vector<32x512xf32>
    %c0_6 = arith.constant 0 : index
    %c0_7 = arith.constant 0 : index
    %8 = vector.load %arg4[%c0_6, %c0_7] : memref<32x32xf32, #tpu.memory_space<vmem>>, vector<32x32xf32>
    %cst_8 = arith.constant dense<0.000000e+00> : vector<32x512xf32>
    %9 = tpu.matmul %8, %7, %cst_8 {dimension_numbers = #tpu.dot_dimension_numbers<[1], [0], [0], [1], [0, 0, 1, 1], [], []>} : vector<32x32xf32>, vector<32x512xf32>, vector<32x512xf32> -> vector<32x512xf32>
    %c0_9 = arith.constant 0 : index
    %c0_10 = arith.constant 0 : index
    %10 = vector.load %arg5[%c0_9, %c0_10] : memref<32x1xf32, #tpu.memory_space<vmem>>, vector<32x1xf32>
    %11 = vector.broadcast %10 : vector<32x1xf32> to vector<32x512xf32>
    %12 = arith.addf %9, %11 : vector<32x512xf32>
    %cst_11 = arith.constant 0.000000e+00 : f32
    %13 = vector.broadcast %cst_11 : f32 to vector<32x512xf32>
    %14 = arith.maximumf %12, %13 : vector<32x512xf32>
    %c0_12 = arith.constant 0 : index
    %c0_13 = arith.constant 0 : index
    %15 = vector.load %arg6[%c0_12, %c0_13] : memref<16x32xf32, #tpu.memory_space<vmem>>, vector<16x32xf32>
    %cst_14 = arith.constant dense<0.000000e+00> : vector<16x512xf32>
    %16 = tpu.matmul %15, %14, %cst_14 {dimension_numbers = #tpu.dot_dimension_numbers<[1], [0], [0], [1], [0, 0, 1, 1], [], []>} : vector<16x32xf32>, vector<32x512xf32>, vector<16x512xf32> -> vector<16x512xf32>
    %c0_15 = arith.constant 0 : index
    %c0_16 = arith.constant 0 : index
    %17 = vector.load %arg7[%c0_15, %c0_16] : memref<16x1xf32, #tpu.memory_space<vmem>>, vector<16x1xf32>
    %18 = vector.broadcast %17 : vector<16x1xf32> to vector<16x512xf32>
    %19 = arith.addf %16, %18 : vector<16x512xf32>
    %cst_17 = arith.constant dense<0xFF800000> : vector<512xf32>
    %20 = vector.multi_reduction <maximumf>, %19, %cst_17 [0] : vector<16x512xf32> to vector<512xf32>
    %21 = vector.shape_cast %20 : vector<512xf32> to vector<1x512xf32>
    %22 = vector.broadcast %21 : vector<1x512xf32> to vector<16x512xf32>
    %23 = arith.subf %19, %22 : vector<16x512xf32>
    %24 = math.exp %23 : vector<16x512xf32>
    %cst_18 = arith.constant dense<0.000000e+00> : vector<512xf32>
    %25 = vector.multi_reduction <add>, %24, %cst_18 [0] : vector<16x512xf32> to vector<512xf32>
    %26 = vector.shape_cast %25 : vector<512xf32> to vector<1x512xf32>
    %27 = tpu.reciprocal %26 : vector<1x512xf32> -> vector<1x512xf32>
    %28 = vector.broadcast %27 : vector<1x512xf32> to vector<16x512xf32>
    %29 = arith.mulf %24, %28 : vector<16x512xf32>
    %30 = arith.mulf %29, %0 : vector<16x512xf32>
    %cst_19 = arith.constant dense<0.000000e+00> : vector<512xf32>
    %31 = vector.multi_reduction <add>, %30, %cst_19 [0] : vector<16x512xf32> to vector<512xf32>
    %32 = vector.shape_cast %31 : vector<512xf32> to vector<1x512xf32>
    %c0_20 = arith.constant 0 : index
    %c0_21 = arith.constant 0 : index
    %33 = vector.load %arg8[%c0_20, %c0_21] : memref<1x512xf32, #tpu.memory_space<vmem>>, vector<1x512xf32>
    tpu.vector_store %arg8[%c0_20, %c0_21], %32 {strides = array<i32>} : memref<1x512xf32, #tpu.memory_space<vmem>>, vector<1x512xf32>,
    return
  }
  func.func @transform_0(%arg0: i32) -> (i32, i32) {
    %c0_i32 = arith.constant 0 : i32
    %c0_i32_0 = arith.constant 0 : i32
    return %c0_i32, %arg0 : i32, i32
  }
  func.func @transform_1(%arg0: i32) -> (i32, i32) {
    %c0_i32 = arith.constant 0 : i32
    %c0_i32_0 = arith.constant 0 : i32
    %c0_i32_1 = arith.constant 0 : i32
    return %c0_i32, %c0_i32_0 : i32, i32
  }
  func.func @transform_2(%arg0: i32) -> (i32, i32) {
    %c0_i32 = arith.constant 0 : i32
    %c0_i32_0 = arith.constant 0 : i32
    %c0_i32_1 = arith.constant 0 : i32
    return %c0_i32, %c0_i32_0 : i32, i32
  }
  func.func @transform_3(%arg0: i32) -> (i32, i32) {
    %c0_i32 = arith.constant 0 : i32
    %c0_i32_0 = arith.constant 0 : i32
    %c0_i32_1 = arith.constant 0 : i32
    return %c0_i32, %c0_i32_0 : i32, i32
  }
  func.func @transform_4(%arg0: i32) -> (i32, i32) {
    %c0_i32 = arith.constant 0 : i32
    %c0_i32_0 = arith.constant 0 : i32
    %c0_i32_1 = arith.constant 0 : i32
    return %c0_i32, %c0_i32_0 : i32, i32
  }
  func.func @transform_5(%arg0: i32) -> (i32, i32) {
    %c0_i32 = arith.constant 0 : i32
    %c0_i32_0 = arith.constant 0 : i32
    %c0_i32_1 = arith.constant 0 : i32
    return %c0_i32, %c0_i32_0 : i32, i32
  }
  func.func @transform_6(%arg0: i32) -> (i32, i32) {
    %c0_i32 = arith.constant 0 : i32
    %c0_i32_0 = arith.constant 0 : i32
    %c0_i32_1 = arith.constant 0 : i32
    return %c0_i32, %c0_i32_0 : i32, i32
  }
  func.func @transform_7(%arg0: i32) -> (i32, i32) {
    %c0_i32 = arith.constant 0 : i32
    %c0_i32_0 = arith.constant 0 : i32
    return %c0_i32, %arg0 : i32, i32
  }
}

</mosaic_0001>

<llo_original>
// kernel: tpu_custom_call.1
$region0: #{tpu_custom_call.1}
  #allocation0 [shape = 'u32[]', space=smem, size = 0x4, offset = 0x4, fixed_abs, tag = 'smem constant byte address 0x4 - core index']
  #allocation1 [shape = 'u32[144,128]{1,0:T(1,128)}', space=vmem, size = 0x12000, scoped, tag = 'internal scratch']
  %s0 = inlined_call_operand.vmem [shape: f32[16,512], index: 0, kind: input, shape index: {}]
  %s1 = inlined_call_operand.vmem [shape: f32[32,16], index: 1, kind: input, shape index: {}]
  %s2 = inlined_call_operand.vmem [shape: f32[32,1], index: 2, kind: input, shape index: {}]
  %s3 = inlined_call_operand.vmem [shape: f32[32,32], index: 3, kind: input, shape index: {}]
  %s4 = inlined_call_operand.vmem [shape: f32[32,1], index: 4, kind: input, shape index: {}]
  %s5 = inlined_call_operand.vmem [shape: f32[16,32], index: 5, kind: input, shape index: {}]
  %s6 = inlined_call_operand.vmem [shape: f32[16,1], index: 6, kind: input, shape index: {}]
  %s7 = inlined_call_operand.hbm [shape: f32[1,512], index: 7, kind: output, shape index: {}]
  %s8 = sld [smem:[#allocation0]]
  $region38: #{tpu_custom_call.1} parent=0
    _
  %s10 = ssub.s32 1, %s8
  %s11 = scalar_select 0, %s10, %s8
  $region1: #{tpu_custom_call.1} parent=0
    #allocation2 [shape = 'u8[2048]{0}', space=vmem, size = 0x800, scoped, tag = 'output window, operand 0, single buffered']
    #allocation3 [shape = 's32[1]{0}', space=sflag, size = 0x4, scoped, tag = 'scoped memory for tpu_custom_call.1']
    %12 = vsyncpa [#allocation3], 0
    // Predicated region
    $region2: #{tpu_custom_call.1} parent=1 // pred_check
      _
    $region3: #{tpu_custom_call.1} parent=1 // pred_check_branch
      %14 = sbr.rel (0) target = $region5
    $region4: #{tpu_custom_call.1} parent=1 // pred_region
      _
    $region5: #{tpu_custom_call.1} parent=1 // pred_fallthru
      _
    // Predicated region
    $region6: #{tpu_custom_call.1} parent=1 // pred_check
      _
    $region7: #{tpu_custom_call.1} parent=1 // pred_check_branch
      %16 = sbr.rel (0) target = $region9
    $region8: #{tpu_custom_call.1} parent=1 // pred_region
      _
    $region9: #{tpu_custom_call.1} parent=1 // pred_fallthru
      _
    // Predicated region
    $region10: #{tpu_custom_call.1} parent=1 // pred_check
      _
    $region11: #{tpu_custom_call.1} parent=1 // pred_check_branch
      %18 = sbr.rel (0) target = $region13
    $region12: #{tpu_custom_call.1} parent=1 // pred_region
      _
    $region13: #{tpu_custom_call.1} parent=1 // pred_fallthru
      _
    // Predicated region
    $region14: #{tpu_custom_call.1} parent=1 // pred_check
      _
    $region15: #{tpu_custom_call.1} parent=1 // pred_check_branch
      %20 = sbr.rel (0) target = $region17
    $region16: #{tpu_custom_call.1} parent=1 // pred_region
      _
    $region17: #{tpu_custom_call.1} parent=1 // pred_fallthru
      _
    // Predicated region
    $region18: #{tpu_custom_call.1} parent=1 // pred_check
      _
    $region19: #{tpu_custom_call.1} parent=1 // pred_check_branch
      %22 = sbr.rel (0) target = $region21
    $region20: #{tpu_custom_call.1} parent=1 // pred_region
      _
    $region21: #{tpu_custom_call.1} parent=1 // pred_fallthru
      _
    // Predicated region
    $region22: #{tpu_custom_call.1} parent=1 // pred_check
      _
    $region23: #{tpu_custom_call.1} parent=1 // pred_check_branch
      %24 = sbr.rel (0) target = $region25
    $region24: #{tpu_custom_call.1} parent=1 // pred_region
      _
    $region25: #{tpu_custom_call.1} parent=1 // pred_fallthru
      _
    // Predicated region
    $region26: #{tpu_custom_call.1} parent=1 // pred_check
      _
    $region27: #{tpu_custom_call.1} parent=1 // pred_check_branch
      %26 = sbr.rel (0) target = $region29
    $region28: #{tpu_custom_call.1} parent=1 // pred_region
      _
    $region29: #{tpu_custom_call.1} parent=1 // pred_fallthru
      _
    %v27 = vld [vmem:[%s0] sm:$0xff]
    %v28 = vld [vmem:[%s0 + $0x8] sm:$0xff]
    %v29 = vld [vmem:[%s0 + $0x10] sm:$0xff]
    %v30 = vld [vmem:[%s0 + $0x18] sm:$0xff]
    %v31 = vld [vmem:[%s0 + $0x20] sm:$0xff]
    %v32 = vld [vmem:[%s0 + $0x28] sm:$0xff]
    %v33 = vld [vmem:[%s0 + $0x30] sm:$0xff]
    %v34 = vld [vmem:[%s0 + $0x38] sm:$0xff]
    %v35 = vld [vmem:[%s1] sm:$0xff]
    %v36 = vld [vmem:[%s1 + $0x8] sm:$0xff]
    %v37 = vld [vmem:[%s1 + $0x10] sm:$0xff]
    %v38 = vld [vmem:[%s1 + $0x18] sm:$0xff]
    %v39 = vld [vmem:[%s2] sm:$0xff]
    %v40 = vld [vmem:[%s2 + $0x8] sm:$0xff]
    %v41 = vld [vmem:[%s2 + $0x10] sm:$0xff]
    %v42 = vld [vmem:[%s2 + $0x18] sm:$0xff]
    %44 = vset.pattern.permute.xlu0 0
    %45 = vperm.xlu0 %44, %v39
    %v46 = vpop.permute.xlu0 %45
    %49 = vset.pattern.permute.xlu0 0
    %50 = vperm.xlu0 %49, %v40
    %v51 = vpop.permute.xlu0 %50
    %54 = vset.pattern.permute.xlu0 0
    %55 = vperm.xlu0 %54, %v41
    %v56 = vpop.permute.xlu0 %55
    %59 = vset.pattern.permute.xlu0 0
    %60 = vperm.xlu0 %59, %v42
    %v61 = vpop.permute.xlu0 %60
    %vm63 = vcmask 130048
    %v65 = vsel %vm63, %v35, 0
    %v68 = vsel %vm63, %v36, 0
    %v71 = vsel %vm63, %v37, 0
    %v74 = vsel %vm63, %v38, 0
    %76 = vmatprep.subr.mxu0 %v28
    %77 = vmatpush1.msra.mxu0 %v27
    %78 = vmatprep.subr.mxu0 %v32
    %79 = vmatpush1.msra.mxu0 %v31
    %80 = vmatprep.subr.mxu0 0.0
    %81 = vmatpush1.msra.mxu0 0.0
    %82 = vmatprep.subr.mxu0 0.0
    %83 = vmatpush1.msra.mxu0 0.0
    %84 = vmatprep.subr.mxu0 0.0
    %85 = vmatpush1.msra.mxu0 0.0
    %86 = vmatprep.subr.mxu0 0.0
    %87 = vmatpush1.msra.mxu0 0.0
    %88 = vmatprep.subr.mxu0 0.0
    %89 = vmatpush1.msra.mxu0 0.0
    %90 = vmatprep.subr.mxu0 0.0
    %91 = vmatpush1.msra.mxu0 0.0
    %92 = vmatprep.subr.mxu0 0.0
    %93 = vmatpush1.msra.mxu0 0.0
    %94 = vmatprep.subr.mxu0 0.0
    %95 = vmatpush1.msra.mxu0 0.0
    %96 = vmatprep.subr.mxu0 0.0
    %97 = vmatpush1.msra.mxu0 0.0
    %98 = vmatprep.subr.mxu0 0.0
    %99 = vmatpush1.msra.mxu0 0.0
    %100 = vmatprep.subr.mxu0 0.0
    %101 = vmatpush1.msra.mxu0 0.0
    %102 = vmatprep.subr.mxu0 0.0
    %103 = vmatpush1.msra.mxu0 0.0
    %104 = vmatprep.subr.mxu0 0.0
    %105 = vmatpush1.msra.mxu0 0.0
    %106 = vmatprep.subr.mxu0 0.0
    %107 = vmatpush1.msra.mxu0 0.0
    %108 = vmatprep.subr.mxu0 0.0
    %109 = vmatpush1.msra.mxu0 0.0
    %110 = vmatprep.subr.mxu0 0.0
    %111 = vmatpush1.msra.mxu0 0.0
    %112 = vmatprep.subr.mxu0 0.0
    %113 = vmatpush1.msra.mxu0 0.0
    %114 = vmatprep.subr.mxu0 0.0
    %115 = vmatpush1.msra.mxu0 0.0
    %116 = vmatprep.subr.mxu0 0.0
    %117 = vmatpush1.msra.mxu0 0.0
    %118 = vmatprep.subr.mxu0 0.0
    %119 = vmatpush1.msra.mxu0 0.0
    %120 = vmatprep.subr.mxu0 0.0
    %121 = vmatpush1.msra.mxu0 0.0
    %122 = vmatprep.subr.mxu0 0.0
    %123 = vmatpush1.msra.mxu0 0.0
    %124 = vmatprep.subr.mxu0 0.0
    %125 = vmatpush1.msra.mxu0 0.0
    %126 = vmatprep.subr.mxu0 0.0
    %127 = vmatpush1.msra.mxu0 0.0
    %128 = vmatprep.subr.mxu0 0.0
    %129 = vmatpush1.msra.mxu0 0.0
    %130 = vmatprep.subr.mxu0 0.0
    %131 = vmatpush1.msra.mxu0 0.0
    %132 = vmatprep.subr.mxu0 0.0
    %133 = vmatpush1.msra.mxu0 0.0
    %134 = vmatprep.subr.mxu0 0.0
    %135 = vmatpush1.msra.mxu0 0.0
    %136 = vmatprep.subr.mxu0 0.0
    %137 = vmatpush1.msra.mxu0 0.0
    %138 = vmatprep.subr.mxu0 0.0
    %139 = vmatpush1.msra.mxu0 0.0
    %140 = vmatprep.mubr.f32.mxu0 0.0
    %141 = vmatmul.mubr.f32.gmra.mrb[0].mxu0 %v65
    %v142 = vpop.f32.mrb[0].mxu0
    %v143 = vadd.f32 %v46, %v142
    %v144 = vpop.f32.mrb[0].mxu0
    %v145 = vadd.f32 %v46, %v144
    %146 = vmatprep.mubr.f32.mxu0 0.0
    %147 = vmatmul.mubr.f32.gmra.mrb[0].mxu0 %v68
    %v148 = vpop.f32.mrb[0].mxu0
    %v149 = vadd.f32 %v51, %v148
    %v150 = vpop.f32.mrb[0].mxu0
    %v151 = vadd.f32 %v51, %v150
    %152 = vmatprep.mubr.f32.mxu0 0.0
    %153 = vmatmul.mubr.f32.gmra.mrb[0].mxu0 %v71
    %v154 = vpop.f32.mrb[0].mxu0
    %v155 = vadd.f32 %v56, %v154
    %v156 = vpop.f32.mrb[0].mxu0
    %v157 = vadd.f32 %v56, %v156
    %158 = vmatprep.mubr.f32.mxu0 0.0
    %159 = vmatmul.mubr.f32.gmra.mrb[0].mxu0 %v74
    %v160 = vpop.f32.mrb[0].mxu0
    %v161 = vadd.f32 %v61, %v160
    %v162 = vpop.f32.mrb[0].mxu0
    %v163 = vadd.f32 %v61, %v162
    %164 = vdwg.mxu0
    %165 = vmatprep.subr.mxu0 %v30
    %166 = vmatpush1.msra.mxu0 %v29
    %167 = vmatprep.subr.mxu0 %v34
    %168 = vmatpush1.msra.mxu0 %v33
    %169 = vmatprep.subr.mxu0 0.0
    %170 = vmatpush1.msra.mxu0 0.0
    %171 = vmatprep.subr.mxu0 0.0
    %172 = vmatpush1.msra.mxu0 0.0
    %173 = vmatprep.subr.mxu0 0.0
    %174 = vmatpush1.msra.mxu0 0.0
    %175 = vmatprep.subr.mxu0 0.0
    %176 = vmatpush1.msra.mxu0 0.0
    %177 = vmatprep.subr.mxu0 0.0
    %178 = vmatpush1.msra.mxu0 0.0
    %179 = vmatprep.subr.mxu0 0.0
    %180 = vmatpush1.msra.mxu0 0.0
    %181 = vmatprep.subr.mxu0 0.0
    %182 = vmatpush1.msra.mxu0 0.0
    %183 = vmatprep.subr.mxu0 0.0
    %184 = vmatpush1.msra.mxu0 0.0
    %185 = vmatprep.subr.mxu0 0.0
    %186 = vmatpush1.msra.mxu0 0.0
    %187 = vmatprep.subr.mxu0 0.0
    %188 = vmatpush1.msra.mxu0 0.0
    %189 = vmatprep.subr.mxu0 0.0
    %190 = vmatpush1.msra.mxu0 0.0
    %191 = vmatprep.subr.mxu0 0.0
    %192 = vmatpush1.msra.mxu0 0.0
    %193 = vmatprep.subr.mxu0 0.0
    %194 = vmatpush1.msra.mxu0 0.0
    %195 = vmatprep.subr.mxu0 0.0
    %196 = vmatpush1.msra.mxu0 0.0
    %197 = vmatprep.subr.mxu0 0.0
    %198 = vmatpush1.msra.mxu0 0.0
    %199 = vmatprep.subr.mxu0 0.0
    %200 = vmatpush1.msra.mxu0 0.0
    %201 = vmatprep.subr.mxu0 0.0
    %202 = vmatpush1.msra.mxu0 0.0
    %203 = vmatprep.subr.mxu0 0.0
    %204 = vmatpush1.msra.mxu0 0.0
    %205 = vmatprep.subr.mxu0 0.0
    %206 = vmatpush1.msra.mxu0 0.0
    %207 = vmatprep.subr.mxu0 0.0
    %208 = vmatpush1.msra.mxu0 0.0
    %209 = vmatprep.subr.mxu0 0.0
    %210 = vmatpush1.msra.mxu0 0.0
    %211 = vmatprep.subr.mxu0 0.0
    %212 = vmatpush1.msra.mxu0 0.0
    %213 = vmatprep.subr.mxu0 0.0
    %214 = vmatpush1.msra.mxu0 0.0
    %215 = vmatprep.subr.mxu0 0.0
    %216 = vmatpush1.msra.mxu0 0.0
    %217 = vmatprep.subr.mxu0 0.0
    %218 = vmatpush1.msra.mxu0 0.0
    %219 = vmatprep.subr.mxu0 0.0
    %220 = vmatpush1.msra.mxu0 0.0
    %221 = vmatprep.subr.mxu0 0.0
    %222 = vmatpush1.msra.mxu0 0.0
    %223 = vmatprep.subr.mxu0 0.0
    %224 = vmatpush1.msra.mxu0 0.0
    %225 = vmatprep.subr.mxu0 0.0
    %226 = vmatpush1.msra.mxu0 0.0
    %227 = vmatprep.subr.mxu0 0.0
    %228 = vmatpush1.msra.mxu0 0.0
    %229 = vmatprep.mubr.f32.mxu0 0.0
    %230 = vmatmul.mubr.f32.gmra.mrb[0].mxu0 %v65
    %v231 = vpop.f32.mrb[0].mxu0
    %v232 = vadd.f32 %v46, %v231
    %v233 = vpop.f32.mrb[0].mxu0
    %v234 = vadd.f32 %v46, %v233
    %235 = vmatprep.mubr.f32.mxu0 0.0
    %236 = vmatmul.mubr.f32.gmra.mrb[0].mxu0 %v68
    %v237 = vpop.f32.mrb[0].mxu0
    %v238 = vadd.f32 %v51, %v237
    %v239 = vpop.f32.mrb[0].mxu0
    %v240 = vadd.f32 %v51, %v239
    %241 = vmatprep.mubr.f32.mxu0 0.0
    %242 = vmatmul.mubr.f32.gmra.mrb[0].mxu0 %v71
    %v243 = vpop.f32.mrb[0].mxu0
    %v244 = vadd.f32 %v56, %v243
    %v245 = vpop.f32.mrb[0].mxu0
    %v246 = vadd.f32 %v56, %v245
    %247 = vmatprep.mubr.f32.mxu0 0.0
    %248 = vmatmul.mubr.f32.gmra.mrb[0].mxu0 %v74
    %v249 = vpop.f32.mrb[0].mxu0
    %v250 = vadd.f32 %v61, %v249
    %v251 = vpop.f32.mrb[0].mxu0
    %v252 = vadd.f32 %v61, %v251
    %253 = vdwg.mxu0
    %v254 = vmax.f32 %v143, 0.0
    %v255 = vmax.f32 %v145, 0.0
    %v256 = vmax.f32 %v232, 0.0
    %v257 = vmax.f32 %v234, 0.0
    %v258 = vmax.f32 %v149, 0.0
    %v259 = vmax.f32 %v151, 0.0
    %v260 = vmax.f32 %v238, 0.0
    %v261 = vmax.f32 %v240, 0.0
    %v262 = vmax.f32 %v155, 0.0
    %v263 = vmax.f32 %v157, 0.0
    %v264 = vmax.f32 %v244, 0.0
    %v265 = vmax.f32 %v246, 0.0
    %v266 = vmax.f32 %v161, 0.0
    %v267 = vmax.f32 %v163, 0.0
    %v268 = vmax.f32 %v250, 0.0
    %v269 = vmax.f32 %v252, 0.0
    %v270 = vld [vmem:[%s3] sm:$0xff]
    %v271 = vld [vmem:[%s3 + $0x8] sm:$0xff]
    %v272 = vld [vmem:[%s3 + $0x10] sm:$0xff]
    %v273 = vld [vmem:[%s3 + $0x18] sm:$0xff]
    %v274 = vld [vmem:[%s4] sm:$0xff]
    %v275 = vld [vmem:[%s4 + $0x8] sm:$0xff]
    %v276 = vld [vmem:[%s4 + $0x10] sm:$0xff]
    %v277 = vld [vmem:[%s4 + $0x18] sm:$0xff]
    %279 = vset.pattern.permute.xlu0 0
    %280 = vperm.xlu0 %279, %v274
    %v281 = vpop.permute.xlu0 %280
    %284 = vset.pattern.permute.xlu0 0
    %285 = vperm.xlu0 %284, %v275
    %v286 = vpop.permute.xlu0 %285
    %289 = vset.pattern.permute.xlu0 0
    %290 = vperm.xlu0 %289, %v276
    %v291 = vpop.permute.xlu0 %290
    %294 = vset.pattern.permute.xlu0 0
    %295 = vperm.xlu0 %294, %v277
    %v296 = vpop.permute.xlu0 %295
    %vm298 = vcmask 261120
    %v300 = vsel %vm298, %v270, 0
    %v303 = vsel %vm298, %v271, 0
    %v306 = vsel %vm298, %v272, 0
    %v309 = vsel %vm298, %v273, 0
    %311 = vmatprep.subr.mxu0 %v255
    %312 = vmatpush1.msra.mxu0 %v254
    %313 = vmatprep.subr.mxu0 %v259
    %314 = vmatpush1.msra.mxu0 %v258
    %315 = vmatprep.subr.mxu0 %v263
    %316 = vmatpush1.msra.mxu0 %v262
    %317 = vmatprep.subr.mxu0 %v267
    %318 = vmatpush1.msra.mxu0 %v266
    %319 = vmatprep.subr.mxu0 0.0
    %320 = vmatpush1.msra.mxu0 0.0
    %321 = vmatprep.subr.mxu0 0.0
    %322 = vmatpush1.msra.mxu0 0.0
    %323 = vmatprep.subr.mxu0 0.0
    %324 = vmatpush1.msra.mxu0 0.0
    %325 = vmatprep.subr.mxu0 0.0
    %326 = vmatpush1.msra.mxu0 0.0
    %327 = vmatprep.subr.mxu0 0.0
    %328 = vmatpush1.msra.mxu0 0.0
    %329 = vmatprep.subr.mxu0 0.0
    %330 = vmatpush1.msra.mxu0 0.0
    %331 = vmatprep.subr.mxu0 0.0
    %332 = vmatpush1.msra.mxu0 0.0
    %333 = vmatprep.subr.mxu0 0.0
    %334 = vmatpush1.msra.mxu0 0.0
    %335 = vmatprep.subr.mxu0 0.0
    %336 = vmatpush1.msra.mxu0 0.0
    %337 = vmatprep.subr.mxu0 0.0
    %338 = vmatpush1.msra.mxu0 0.0
    %339 = vmatprep.subr.mxu0 0.0
    %340 = vmatpush1.msra.mxu0 0.0
    %341 = vmatprep.subr.mxu0 0.0
    %342 = vmatpush1.msra.mxu0 0.0
    %343 = vmatprep.subr.mxu0 0.0
    %344 = vmatpush1.msra.mxu0 0.0
    %345 = vmatprep.subr.mxu0 0.0
    %346 = vmatpush1.msra.mxu0 0.0
    %347 = vmatprep.subr.mxu0 0.0
    %348 = vmatpush1.msra.mxu0 0.0
    %349 = vmatprep.subr.mxu0 0.0
    %350 = vmatpush1.msra.mxu0 0.0
    %351 = vmatprep.subr.mxu0 0.0
    %352 = vmatpush1.msra.mxu0 0.0
    %353 = vmatprep.subr.mxu0 0.0
    %354 = vmatpush1.msra.mxu0 0.0
    %355 = vmatprep.subr.mxu0 0.0
    %356 = vmatpush1.msra.mxu0 0.0
    %357 = vmatprep.subr.mxu0 0.0
    %358 = vmatpush1.msra.mxu0 0.0
    %359 = vmatprep.subr.mxu0 0.0
    %360 = vmatpush1.msra.mxu0 0.0
    %361 = vmatprep.subr.mxu0 0.0
    %362 = vmatpush1.msra.mxu0 0.0
    %363 = vmatprep.subr.mxu0 0.0
    %364 = vmatpush1.msra.mxu0 0.0
    %365 = vmatprep.subr.mxu0 0.0
    %366 = vmatpush1.msra.mxu0 0.0
    %367 = vmatprep.subr.mxu0 0.0
    %368 = vmatpush1.msra.mxu0 0.0
    %369 = vmatprep.subr.mxu0 0.0
    %370 = vmatpush1.msra.mxu0 0.0
    %371 = vmatprep.subr.mxu0 0.0
    %372 = vmatpush1.msra.mxu0 0.0
    %373 = vmatprep.subr.mxu0 0.0
    %374 = vmatpush1.msra.mxu0 0.0
    %375 = vmatprep.mubr.f32.mxu0 0.0
    %376 = vmatmul.mubr.f32.gmra.mrb[0].mxu0 %v300
    %v377 = vpop.f32.mrb[0].mxu0
    %v378 = vadd.f32 %v281, %v377
    %v379 = vpop.f32.mrb[0].mxu0
    %v380 = vadd.f32 %v281, %v379
    %381 = vmatprep.mubr.f32.mxu0 0.0
    %382 = vmatmul.mubr.f32.gmra.mrb[0].mxu0 %v303
    %v383 = vpop.f32.mrb[0].mxu0
    %v384 = vadd.f32 %v286, %v383
    %v385 = vpop.f32.mrb[0].mxu0
    %v386 = vadd.f32 %v286, %v385
    %387 = vmatprep.mubr.f32.mxu0 0.0
    %388 = vmatmul.mubr.f32.gmra.mrb[0].mxu0 %v306
    %v389 = vpop.f32.mrb[0].mxu0
    %v390 = vadd.f32 %v291, %v389
    %v391 = vpop.f32.mrb[0].mxu0
    %v392 = vadd.f32 %v291, %v391
    %393 = vmatprep.mubr.f32.mxu0 0.0
    %394 = vmatmul.mubr.f32.gmra.mrb[0].mxu0 %v309
    %v395 = vpop.f32.mrb[0].mxu0
    %v396 = vadd.f32 %v296, %v395
    %v397 = vpop.f32.mrb[0].mxu0
    %v398 = vadd.f32 %v296, %v397
    %399 = vdwg.mxu0
    %400 = vmatprep.subr.mxu0 %v257
    %401 = vmatpush1.msra.mxu0 %v256
    %402 = vmatprep.subr.mxu0 %v261
    %403 = vmatpush1.msra.mxu0 %v260
    %404 = vmatprep.subr.mxu0 %v265
    %405 = vmatpush1.msra.mxu0 %v264
    %406 = vmatprep.subr.mxu0 %v269
    %407 = vmatpush1.msra.mxu0 %v268
    %408 = vmatprep.subr.mxu0 0.0
    %409 = vmatpush1.msra.mxu0 0.0
    %410 = vmatprep.subr.mxu0 0.0
    %411 = vmatpush1.msra.mxu0 0.0
    %412 = vmatprep.subr.mxu0 0.0
    %413 = vmatpush1.msra.mxu0 0.0
    %414 = vmatprep.subr.mxu0 0.0
    %415 = vmatpush1.msra.mxu0 0.0
    %416 = vmatprep.subr.mxu0 0.0
    %417 = vmatpush1.msra.mxu0 0.0
    %418 = vmatprep.subr.mxu0 0.0
    %419 = vmatpush1.msra.mxu0 0.0
    %420 = vmatprep.subr.mxu0 0.0
    %421 = vmatpush1.msra.mxu0 0.0
    %422 = vmatprep.subr.mxu0 0.0
    %423 = vmatpush1.msra.mxu0 0.0
    %424 = vmatprep.subr.mxu0 0.0
    %425 = vmatpush1.msra.mxu0 0.0
    %426 = vmatprep.subr.mxu0 0.0
    %427 = vmatpush1.msra.mxu0 0.0
    %428 = vmatprep.subr.mxu0 0.0
    %429 = vmatpush1.msra.mxu0 0.0
    %430 = vmatprep.subr.mxu0 0.0
    %431 = vmatpush1.msra.mxu0 0.0
    %432 = vmatprep.subr.mxu0 0.0
    %433 = vmatpush1.msra.mxu0 0.0
    %434 = vmatprep.subr.mxu0 0.0
    %435 = vmatpush1.msra.mxu0 0.0
    %436 = vmatprep.subr.mxu0 0.0
    %437 = vmatpush1.msra.mxu0 0.0
    %438 = vmatprep.subr.mxu0 0.0
    %439 = vmatpush1.msra.mxu0 0.0
    %440 = vmatprep.subr.mxu0 0.0
    %441 = vmatpush1.msra.mxu0 0.0
    %442 = vmatprep.subr.mxu0 0.0
    %443 = vmatpush1.msra.mxu0 0.0
    %444 = vmatprep.subr.mxu0 0.0
    %445 = vmatpush1.msra.mxu0 0.0
    %446 = vmatprep.subr.mxu0 0.0
    %447 = vmatpush1.msra.mxu0 0.0
    %448 = vmatprep.subr.mxu0 0.0
    %449 = vmatpush1.msra.mxu0 0.0
    %450 = vmatprep.subr.mxu0 0.0
    %451 = vmatpush1.msra.mxu0 0.0
    %452 = vmatprep.subr.mxu0 0.0
    %453 = vmatpush1.msra.mxu0 0.0
    %454 = vmatprep.subr.mxu0 0.0
    %455 = vmatpush1.msra.mxu0 0.0
    %456 = vmatprep.subr.mxu0 0.0
    %457 = vmatpush1.msra.mxu0 0.0
    %458 = vmatprep.subr.mxu0 0.0
    %459 = vmatpush1.msra.mxu0 0.0
    %460 = vmatprep.subr.mxu0 0.0
    %461 = vmatpush1.msra.mxu0 0.0
    %462 = vmatprep.subr.mxu0 0.0
    %463 = vmatpush1.msra.mxu0 0.0
    %464 = vmatprep.mubr.f32.mxu0 0.0
    %465 = vmatmul.mubr.f32.gmra.mrb[0].mxu0 %v300
    %v466 = vpop.f32.mrb[0].mxu0
    %v467 = vadd.f32 %v281, %v466
    %v468 = vpop.f32.mrb[0].mxu0
    %v469 = vadd.f32 %v281, %v468
    %470 = vmatprep.mubr.f32.mxu0 0.0
    %471 = vmatmul.mubr.f32.gmra.mrb[0].mxu0 %v303
    %v472 = vpop.f32.mrb[0].mxu0
    %v473 = vadd.f32 %v286, %v472
    %v474 = vpop.f32.mrb[0].mxu0
    %v475 = vadd.f32 %v286, %v474
    %476 = vmatprep.mubr.f32.mxu0 0.0
    %477 = vmatmul.mubr.f32.gmra.mrb[0].mxu0 %v306
    %v478 = vpop.f32.mrb[0].mxu0
    %v479 = vadd.f32 %v291, %v478
    %v480 = vpop.f32.mrb[0].mxu0
    %v481 = vadd.f32 %v291, %v480
    %482 = vmatprep.mubr.f32.mxu0 0.0
    %483 = vmatmul.mubr.f32.gmra.mrb[0].mxu0 %v309
    %v484 = vpop.f32.mrb[0].mxu0
    %v485 = vadd.f32 %v296, %v484
    %v486 = vpop.f32.mrb[0].mxu0
    %v487 = vadd.f32 %v296, %v486
    %488 = vdwg.mxu0
    %v489 = vmax.f32 %v378, 0.0
    %v490 = vmax.f32 %v380, 0.0
    %v491 = vmax.f32 %v467, 0.0
    %v492 = vmax.f32 %v469, 0.0
    %v493 = vmax.f32 %v384, 0.0
    %v494 = vmax.f32 %v386, 0.0
    %v495 = vmax.f32 %v473, 0.0
    %v496 = vmax.f32 %v475, 0.0
    %v497 = vmax.f32 %v390, 0.0
    %v498 = vmax.f32 %v392, 0.0
    %v499 = vmax.f32 %v479, 0.0
    %v500 = vmax.f32 %v481, 0.0
    %v501 = vmax.f32 %v396, 0.0
    %v502 = vmax.f32 %v398, 0.0
    %v503 = vmax.f32 %v485, 0.0
    %v504 = vmax.f32 %v487, 0.0
    %v505 = vld [vmem:[%s5] sm:$0xff]
    %v506 = vld [vmem:[%s5 + $0x8] sm:$0xff]
    %v507 = vld [vmem:[%s6] sm:$0xff]
    %v508 = vld [vmem:[%s6 + $0x8] sm:$0xff]
    %510 = vset.pattern.permute.xlu0 0
    %511 = vperm.xlu0 %510, %v507
    %v512 = vpop.permute.xlu0 %511
    %515 = vset.pattern.permute.xlu0 0
    %516 = vperm.xlu0 %515, %v508
    %v517 = vpop.permute.xlu0 %516
    %v520 = vsel %vm298, %v505, 0
    %v523 = vsel %vm298, %v506, 0
    %525 = vmatprep.subr.mxu0 %v490
    %526 = vmatpush1.msra.mxu0 %v489
    %527 = vmatprep.subr.mxu0 %v494
    %528 = vmatpush1.msra.mxu0 %v493
    %529 = vmatprep.subr.mxu0 %v498
    %530 = vmatpush1.msra.mxu0 %v497
    %531 = vmatprep.subr.mxu0 %v502
    %532 = vmatpush1.msra.mxu0 %v501
    %533 = vmatprep.subr.mxu0 0.0
    %534 = vmatpush1.msra.mxu0 0.0
    %535 = vmatprep.subr.mxu0 0.0
    %536 = vmatpush1.msra.mxu0 0.0
    %537 = vmatprep.subr.mxu0 0.0
    %538 = vmatpush1.msra.mxu0 0.0
    %539 = vmatprep.subr.mxu0 0.0
    %540 = vmatpush1.msra.mxu0 0.0
    %541 = vmatprep.subr.mxu0 0.0
    %542 = vmatpush1.msra.mxu0 0.0
    %543 = vmatprep.subr.mxu0 0.0
    %544 = vmatpush1.msra.mxu0 0.0
    %545 = vmatprep.subr.mxu0 0.0
    %546 = vmatpush1.msra.mxu0 0.0
    %547 = vmatprep.subr.mxu0 0.0
    %548 = vmatpush1.msra.mxu0 0.0
    %549 = vmatprep.subr.mxu0 0.0
    %550 = vmatpush1.msra.mxu0 0.0
    %551 = vmatprep.subr.mxu0 0.0
    %552 = vmatpush1.msra.mxu0 0.0
    %553 = vmatprep.subr.mxu0 0.0
    %554 = vmatpush1.msra.mxu0 0.0
    %555 = vmatprep.subr.mxu0 0.0
    %556 = vmatpush1.msra.mxu0 0.0
    %557 = vmatprep.subr.mxu0 0.0
    %558 = vmatpush1.msra.mxu0 0.0
    %559 = vmatprep.subr.mxu0 0.0
    %560 = vmatpush1.msra.mxu0 0.0
    %561 = vmatprep.subr.mxu0 0.0
    %562 = vmatpush1.msra.mxu0 0.0
    %563 = vmatprep.subr.mxu0 0.0
    %564 = vmatpush1.msra.mxu0 0.0
    %565 = vmatprep.subr.mxu0 0.0
    %566 = vmatpush1.msra.mxu0 0.0
    %567 = vmatprep.subr.mxu0 0.0
    %568 = vmatpush1.msra.mxu0 0.0
    %569 = vmatprep.subr.mxu0 0.0
    %570 = vmatpush1.msra.mxu0 0.0
    %571 = vmatprep.subr.mxu0 0.0
    %572 = vmatpush1.msra.mxu0 0.0
    %573 = vmatprep.subr.mxu0 0.0
    %574 = vmatpush1.msra.mxu0 0.0
    %575 = vmatprep.subr.mxu0 0.0
    %576 = vmatpush1.msra.mxu0 0.0
    %577 = vmatprep.subr.mxu0 0.0
    %578 = vmatpush1.msra.mxu0 0.0
    %579 = vmatprep.subr.mxu0 0.0
    %580 = vmatpush1.msra.mxu0 0.0
    %581 = vmatprep.subr.mxu0 0.0
    %582 = vmatpush1.msra.mxu0 0.0
    %583 = vmatprep.subr.mxu0 0.0
    %584 = vmatpush1.msra.mxu0 0.0
    %585 = vmatprep.subr.mxu0 0.0
    %586 = vmatpush1.msra.mxu0 0.0
    %587 = vmatprep.subr.mxu0 0.0
    %588 = vmatpush1.msra.mxu0 0.0
    %589 = vmatprep.mubr.f32.mxu0 0.0
    %590 = vmatmul.mubr.f32.gmra.mrb[0].mxu0 %v520
    %v591 = vpop.f32.mrb[0].mxu0
    %v592 = vadd.f32 %v512, %v591
    %v593 = vpop.f32.mrb[0].mxu0
    %v594 = vadd.f32 %v512, %v593
    %595 = vmatprep.mubr.f32.mxu0 0.0
    %596 = vmatmul.mubr.f32.gmra.mrb[0].mxu0 %v523
    %v597 = vpop.f32.mrb[0].mxu0
    %v598 = vadd.f32 %v517, %v597
    %v599 = vpop.f32.mrb[0].mxu0
    %v600 = vadd.f32 %v517, %v599
    %601 = vdwg.mxu0
    %602 = vmatprep.subr.mxu0 %v492
    %603 = vmatpush1.msra.mxu0 %v491
    %604 = vmatprep.subr.mxu0 %v496
    %605 = vmatpush1.msra.mxu0 %v495
    %606 = vmatprep.subr.mxu0 %v500
    %607 = vmatpush1.msra.mxu0 %v499
    %608 = vmatprep.subr.mxu0 %v504
    %609 = vmatpush1.msra.mxu0 %v503
    %610 = vmatprep.subr.mxu0 0.0
    %611 = vmatpush1.msra.mxu0 0.0
    %612 = vmatprep.subr.mxu0 0.0
    %613 = vmatpush1.msra.mxu0 0.0
    %614 = vmatprep.subr.mxu0 0.0
    %615 = vmatpush1.msra.mxu0 0.0
    %616 = vmatprep.subr.mxu0 0.0
    %617 = vmatpush1.msra.mxu0 0.0
    %618 = vmatprep.subr.mxu0 0.0
    %619 = vmatpush1.msra.mxu0 0.0
    %620 = vmatprep.subr.mxu0 0.0
    %621 = vmatpush1.msra.mxu0 0.0
    %622 = vmatprep.subr.mxu0 0.0
    %623 = vmatpush1.msra.mxu0 0.0
    %624 = vmatprep.subr.mxu0 0.0
    %625 = vmatpush1.msra.mxu0 0.0
    %626 = vmatprep.subr.mxu0 0.0
    %627 = vmatpush1.msra.mxu0 0.0
    %628 = vmatprep.subr.mxu0 0.0
    %629 = vmatpush1.msra.mxu0 0.0
    %630 = vmatprep.subr.mxu0 0.0
    %631 = vmatpush1.msra.mxu0 0.0
    %632 = vmatprep.subr.mxu0 0.0
    %633 = vmatpush1.msra.mxu0 0.0
    %634 = vmatprep.subr.mxu0 0.0
    %635 = vmatpush1.msra.mxu0 0.0
    %636 = vmatprep.subr.mxu0 0.0
    %637 = vmatpush1.msra.mxu0 0.0
    %638 = vmatprep.subr.mxu0 0.0
    %639 = vmatpush1.msra.mxu0 0.0
    %640 = vmatprep.subr.mxu0 0.0
    %641 = vmatpush1.msra.mxu0 0.0
    %642 = vmatprep.subr.mxu0 0.0
    %643 = vmatpush1.msra.mxu0 0.0
    %644 = vmatprep.subr.mxu0 0.0
    %645 = vmatpush1.msra.mxu0 0.0
    %646 = vmatprep.subr.mxu0 0.0
    %647 = vmatpush1.msra.mxu0 0.0
    %648 = vmatprep.subr.mxu0 0.0
    %649 = vmatpush1.msra.mxu0 0.0
    %650 = vmatprep.subr.mxu0 0.0
    %651 = vmatpush1.msra.mxu0 0.0
    %652 = vmatprep.subr.mxu0 0.0
    %653 = vmatpush1.msra.mxu0 0.0
    %654 = vmatprep.subr.mxu0 0.0
    %655 = vmatpush1.msra.mxu0 0.0
    %656 = vmatprep.subr.mxu0 0.0
    %657 = vmatpush1.msra.mxu0 0.0
    %658 = vmatprep.subr.mxu0 0.0
    %659 = vmatpush1.msra.mxu0 0.0
    %660 = vmatprep.subr.mxu0 0.0
    %661 = vmatpush1.msra.mxu0 0.0
    %662 = vmatprep.subr.mxu0 0.0
    %663 = vmatpush1.msra.mxu0 0.0
    %664 = vmatprep.subr.mxu0 0.0
    %665 = vmatpush1.msra.mxu0 0.0
    %666 = vmatprep.mubr.f32.mxu0 0.0
    %667 = vmatmul.mubr.f32.gmra.mrb[0].mxu0 %v520
    %v668 = vpop.f32.mrb[0].mxu0
    %v669 = vadd.f32 %v512, %v668
    %v670 = vpop.f32.mrb[0].mxu0
    %v671 = vadd.f32 %v512, %v670
    %672 = vmatprep.mubr.f32.mxu0 0.0
    %673 = vmatmul.mubr.f32.gmra.mrb[0].mxu0 %v523
    %v674 = vpop.f32.mrb[0].mxu0
    %v675 = vadd.f32 %v517, %v674
    %v676 = vpop.f32.mrb[0].mxu0
    %v677 = vadd.f32 %v517, %v676
    %678 = vdwg.mxu0
    %v679 = vmax.f32 %v592, %v598
    %v680 = vrot.slane %v679, 4
    %v681 = vmax.f32 %v679, %v680
    %v682 = vrot.slane %v681, 2
    %v683 = vmax.f32 %v681, %v682
    %v684 = vrot.slane %v683, 1
    %v685 = vmax.f32 %v683, %v684
    %v686 = vmax.f32 %v594, %v600
    %v687 = vrot.slane %v686, 4
    %v688 = vmax.f32 %v686, %v687
    %v689 = vrot.slane %v688, 2
    %v690 = vmax.f32 %v688, %v689
    %v691 = vrot.slane %v690, 1
    %v692 = vmax.f32 %v690, %v691
    %v693 = vmax.f32 %v669, %v675
    %v694 = vrot.slane %v693, 4
    %v695 = vmax.f32 %v693, %v694
    %v696 = vrot.slane %v695, 2
    %v697 = vmax.f32 %v695, %v696
    %v698 = vrot.slane %v697, 1
    %v699 = vmax.f32 %v697, %v698
    %v700 = vmax.f32 %v671, %v677
    %v701 = vrot.slane %v700, 4
    %v702 = vmax.f32 %v700, %v701
    %v703 = vrot.slane %v702, 2
    %v704 = vmax.f32 %v702, %v703
    %v705 = vrot.slane %v704, 1
    %v706 = vmax.f32 %v704, %v705
    %v707 = vsub.f32 %v592, %v685
    %v708 = vsub.f32 %v594, %v692
    %v709 = vsub.f32 %v669, %v699
    %v710 = vsub.f32 %v671, %v706
    %v711 = vsub.f32 %v598, %v685
    %v712 = vsub.f32 %v600, %v692
    %v713 = vsub.f32 %v675, %v699
    %v714 = vsub.f32 %v677, %v706
    %v715 = vmul.f32 %v707, 1.442695
    %v716 = vpow.pop %v715
    %v717 = vmul.f32 %v708, 1.442695
    %v718 = vpow.pop %v717
    %v719 = vmul.f32 %v709, 1.442695
    %v720 = vpow.pop %v719
    %v721 = vmul.f32 %v710, 1.442695
    %v722 = vpow.pop %v721
    %v723 = vmul.f32 %v711, 1.442695
    %v724 = vpow.pop %v723
    %v725 = vmul.f32 %v712, 1.442695
    %v726 = vpow.pop %v725
    %v727 = vmul.f32 %v713, 1.442695
    %v728 = vpow.pop %v727
    %v729 = vmul.f32 %v714, 1.442695
    %v730 = vpow.pop %v729
    %v731 = vadd.f32 %v716, %v724
    %v732 = vrot.slane %v731, 4
    %v733 = vadd.f32 %v731, %v732
    %v734 = vrot.slane %v733, 2
    %v735 = vadd.f32 %v733, %v734
    %v736 = vrot.slane %v735, 1
    %v737 = vadd.f32 %v735, %v736
    %v738 = vadd.f32 %v718, %v726
    %v739 = vrot.slane %v738, 4
    %v740 = vadd.f32 %v738, %v739
    %v741 = vrot.slane %v740, 2
    %v742 = vadd.f32 %v740, %v741
    %v743 = vrot.slane %v742, 1
    %v744 = vadd.f32 %v742, %v743
    %v745 = vadd.f32 %v720, %v728
    %v746 = vrot.slane %v745, 4
    %v747 = vadd.f32 %v745, %v746
    %v748 = vrot.slane %v747, 2
    %v749 = vadd.f32 %v747, %v748
    %v750 = vrot.slane %v749, 1
    %v751 = vadd.f32 %v749, %v750
    %v752 = vadd.f32 %v722, %v730
    %v753 = vrot.slane %v752, 4
    %v754 = vadd.f32 %v752, %v753
    %v755 = vrot.slane %v754, 2
    %v756 = vadd.f32 %v754, %v755
    %v757 = vrot.slane %v756, 1
    %v758 = vadd.f32 %v756, %v757
    %v759 = vrcp.pop %v737
    %v760 = vrcp.pop %v744
    %v761 = vrcp.pop %v751
    %v762 = vrcp.pop %v758
    %v763 = vmul.f32 %v716, %v759
    %v764 = vmul.f32 %v718, %v760
    %v765 = vmul.f32 %v720, %v761
    %v766 = vmul.f32 %v722, %v762
    %v767 = vmul.f32 %v724, %v759
    %v768 = vmul.f32 %v726, %v760
    %v769 = vmul.f32 %v728, %v761
    %v770 = vmul.f32 %v730, %v762
    %v771 = vmul.f32 %v763, %v27
    %v772 = vmul.f32 %v764, %v28
    %v773 = vmul.f32 %v765, %v29
    %v774 = vmul.f32 %v766, %v30
    %v775 = vmul.f32 %v767, %v31
    %v776 = vmul.f32 %v768, %v32
    %v777 = vmul.f32 %v769, %v33
    %v778 = vmul.f32 %v770, %v34
    %v779 = vadd.f32 %v771, %v775
    %v780 = vrot.slane %v779, 4
    %v781 = vadd.f32 %v779, %v780
    %v782 = vrot.slane %v781, 2
    %v783 = vadd.f32 %v781, %v782
    %v784 = vrot.slane %v783, 1
    %v785 = vadd.f32 %v783, %v784
    %v786 = vadd.f32 %v772, %v776
    %v787 = vrot.slane %v786, 4
    %v788 = vadd.f32 %v786, %v787
    %v789 = vrot.slane %v788, 2
    %v790 = vadd.f32 %v788, %v789
    %v791 = vrot.slane %v790, 1
    %v792 = vadd.f32 %v790, %v791
    %v793 = vadd.f32 %v773, %v777
    %v794 = vrot.slane %v793, 4
    %v795 = vadd.f32 %v793, %v794
    %v796 = vrot.slane %v795, 2
    %v797 = vadd.f32 %v795, %v796
    %v798 = vrot.slane %v797, 1
    %v799 = vadd.f32 %v797, %v798
    %v800 = vadd.f32 %v774, %v778
    %v801 = vrot.slane %v800, 4
    %v802 = vadd.f32 %v800, %v801
    %v803 = vrot.slane %v802, 2
    %v804 = vadd.f32 %v802, %v803
    %v805 = vrot.slane %v804, 1
    %v806 = vadd.f32 %v804, %v805
    %v811 = vcombine.low %v785, %v792
    %v812 = vcombine.low %v799, %v806
    %v814 = vunpack.c.l.s4 1966171168
    %v815 = vunpack.c.0.s8 %v814
    %v816 = vlaneseq
    %v817 = vshrl.u32 %v816, 7
    %v818 = vsub.s32 %v815, %v817
    %v819 = vrot.slane %v811, %v818
    %v821 = vunpack.c.l.s4 1966171168
    %v822 = vunpack.c.0.s8 %v821
    %v823 = vlaneseq
    %v824 = vshrl.u32 %v823, 7
    %v825 = vsub.s32 %v822, %v824
    %v826 = vrot.slane %v812, %v825
    %v827 = vcombine.low %v819, %v826
    %v829 = vunpack.c.l.s4 1966171168
    %v830 = vunpack.c.0.s8 %v829
    %v831 = vlaneseq
    %v832 = vshrl.u32 %v831, 7
    %v833 = vsub.s32 %v830, %v832
    %v834 = vrot.slane %v827, %v833
    %v836 = vlaneseq
    %vm837 = vcmp.ge.s32.totalorder %v836, 0
    %vm838 = vcmp.lt.s32.totalorder %v836, 512
    %vm839 = vmand %vm837, %vm838
    %840 = vst.msk [vmem:[#allocation2] sm:$0xf] %vm839, %v834
    // Predicated region
    $region30: #{tpu_custom_call.1} parent=1 // pred_check
      _
    $region31: #{tpu_custom_call.1} parent=1 // pred_check_branch
      %842 = sbr.rel (0) target = $region33
    $region32: #{tpu_custom_call.1} parent=1 // pred_region
      %s844 = ssub.s32 64, 64
      %845 = vsyncadd [#allocation3], %s844
      %s847 = sshll.u32 [#allocation2], 4
      %s848 = int_to_ptr.vmem [resolvable:$true] %s847
      %850 = dma.vmem_to_hbm [thread:$0]  %s848, 64, %s7, [#allocation3]
    $region33: #{tpu_custom_call.1} parent=1 // pred_fallthru
      _
    // Predicated region
    $region34: #{tpu_custom_call.1} parent=1 // pred_check
      _
    $region35: #{tpu_custom_call.1} parent=1 // pred_check_branch
      %852 = sbr.rel (0) target = $region37
    $region36: #{tpu_custom_call.1} parent=1 // pred_region
      %853 = dma.done [#allocation3], 64
    $region37: #{tpu_custom_call.1} parent=1 // pred_fallthru
      _
    %854 = vsyncpa [#allocation3], 1

</llo_original>
